<compile_context>
chip_gen: v7x
topology: tpu7x:2x2x1
jax: 0.10.0
libtpu: 0.0.40
codegen_flags: <defaults>
</compile_context>

<pallas_src>
import functools

import numpy as np
import jax
import jax.numpy as jnp
from jax.experimental import pallas as pl
from jax.experimental.pallas import tpu as pltpu


def _copy_kernel(x_ref, o_ref):
    # Identity copy: the only compute in a view/reshape.
    o_ref[...] = x_ref[...]


def _sublane_multiple(dtype):
    # f32 -> 8, bf16/f16 -> 16, int8/fp8 -> 32 (sub-32-bit dtypes pack sublanes).
    itemsize = jnp.dtype(dtype).itemsize
    return max(8, 32 // max(itemsize, 1))


def view_module_forward(x, shape, *, tile_rows=None, donate_input=False):
    """Equivalent of ViewModule(shape).forward(x) == x.view(-1, *shape)."""
    shape = tuple(int(s) for s in shape)
    total = int(np.prod(x.shape)) if x.ndim > 0 else 1
    inner = int(np.prod(shape)) if len(shape) > 0 else 1
    if inner <= 0 or total % inner != 0:
        raise ValueError(f"cannot view {x.shape} as (-1, {shape})")
    out_shape = (total // inner,) + shape

    itemsize = jnp.dtype(x.dtype).itemsize
    aliases = {0: 0} if donate_input else {}

    # Lane-dense slab: largest lane width (multiple of 128) dividing `total`.
    lane = next((c for c in (1024, 512, 256, 128) if total % c == 0), None)

    if lane is None:
        # Fallback for element counts not divisible by 128: a single
        # full-array block (block dims equal to the full array dims are legal).
        # TODO(synk): very large non-128-divisible tensors would need a
        # bulk + masked-tail split; not needed for this module's typical use.
        slab = jnp.reshape(x, (1, total))
        out2d = pl.pallas_call(
            _copy_kernel,
            out_shape=jax.ShapeDtypeStruct((1, total), x.dtype),
            grid=(1,),
            in_specs=[pl.BlockSpec((1, total), lambda i: (0, 0))],
            out_specs=pl.BlockSpec((1, total), lambda i: (0, 0)),
            input_output_aliases=aliases,
        )(slab)
        return jnp.reshape(out2d, out_shape)

    rows = total // lane
    sub = _sublane_multiple(x.dtype)

    if tile_rows is None:
        # ~4 MiB per tile buffer ("biggest that fits VMEM"): double-buffered
        # in + out (4 buffers, ~16 MiB) fits the 32 MiB scoped limit we
        # request below on every TPU generation, while staying well past the
        # point of diminishing returns on the HBM roofline.
        target_bytes = 4 * 1024 * 1024
        tile_rows = max(sub, (target_bytes // (lane * itemsize)) // sub * sub)
    tile_rows = min(int(tile_rows), rows)

    # Metadata-only (row-major) reshape to the lane-dense copy slab.
    slab = jnp.reshape(x, (rows, lane))

    out2d = pl.pallas_call(
        _copy_kernel,
        out_shape=jax.ShapeDtypeStruct((rows, lane), x.dtype),
        grid=(pl.cdiv(rows, tile_rows),),
        in_specs=[pl.BlockSpec((tile_rows, lane), lambda i: (i, 0))],
        out_specs=pl.BlockSpec((tile_rows, lane), lambda i: (i, 0)),
        input_output_aliases=aliases,
        compiler_params=pltpu.CompilerParams(
            dimension_semantics=("parallel",),
            vmem_limit_bytes=32 * 1024 * 1024),
    )(slab)

    # Metadata-only reshape to the user-visible (-1, *shape).
    return jnp.reshape(out2d, out_shape)


# Jitted entry: fuses the wrapper reshapes with the pallas_call so they stay
# metadata-only end to end.
view_module_forward_jit = jax.jit(
    view_module_forward,
    static_argnames=("shape", "tile_rows", "donate_input"),
)


if __name__ == "__main__":
    key0, key1 = jax.random.split(jax.random.PRNGKey(0))

    # 1) Module-style input: NCHW conv tensor (B, C, H, W), view(-1, 8, 32).
    x = jax.random.normal(key0, (2, 4, 16, 16), dtype=jnp.float32)
    target_shape = (8, 32)
    y = jax.block_until_ready(view_module_forward_jit(x, target_shape))
    ref = jnp.reshape(x, (-1,) + target_shape)
    assert y.shape == ref.shape, (y.shape, ref.shape)
    assert y.dtype == x.dtype
    np.testing.assert_array_equal(np.asarray(y), np.asarray(ref))

    # 2) Force a multi-block grid (exercise the pipelined path) on a still
    #    small tensor: 16384 elems -> slab (16, 1024), tile_rows=8 -> grid=(2,).
    x2 = jax.random.normal(key1, (8, 4, 16, 32), dtype=jnp.float32)
    y2 = jax.block_until_ready(
        view_module_forward_jit(x2, (16, 32), tile_rows=8))
    ref2 = jnp.reshape(x2, (-1, 16, 32))
    assert y2.shape == ref2.shape and y2.dtype == x2.dtype
    np.testing.assert_array_equal(np.asarray(y2), np.asarray(ref2))

    # 3) Opt-in donation path (same semantics; alias exercised once).
    x3 = jax.random.normal(key0, (2, 4, 16, 16), dtype=jnp.float32)
    ref3 = jnp.reshape(x3, (-1,) + target_shape)
    y3 = jax.block_until_ready(
        view_module_forward_jit(x3, target_shape, donate_input=True))
    assert y3.shape == ref3.shape and y3.dtype == x3.dtype
    np.testing.assert_array_equal(np.asarray(y3), np.asarray(ref3))

    print("KERNEL_OK")
</pallas_src>

<mosaic_0001>
module attributes {stable_mosaic.version = 11 : i64} {
  func.func @_copy_kernel(%arg0: i32, %arg1: memref<2x1024xf32, #tpu.memory_space<vmem>>, %arg2: memref<2x1024xf32, #tpu.memory_space<vmem>>) attributes {dimension_semantics = [#tpu.dimension_semantics<parallel>], iteration_bounds = array<i64: 1>, scalar_prefetch = 0 : i64, scratch_operands = 0 : i64, tpu.core_type = #tpu.core_type<tc>, window_params = [{transform_indices = @transform_0, window_bounds = array<i64: 2, 1024>}, {transform_indices = @transform_1, window_bounds = array<i64: 2, 1024>}]} {
    %c0 = arith.constant 0 : index
    %c0_0 = arith.constant 0 : index
    %0 = vector.load %arg1[%c0, %c0_0] : memref<2x1024xf32, #tpu.memory_space<vmem>>, vector<2x1024xf32>
    %c0_1 = arith.constant 0 : index
    %c0_2 = arith.constant 0 : index
    %1 = vector.load %arg2[%c0_1, %c0_2] : memref<2x1024xf32, #tpu.memory_space<vmem>>, vector<2x1024xf32>
    tpu.vector_store %arg2[%c0_1, %c0_2], %0 {strides = array<i32>} : memref<2x1024xf32, #tpu.memory_space<vmem>>, vector<2x1024xf32>,
    return
  }
  func.func @transform_0(%arg0: i32) -> (i32, i32) {
    %c0_i32 = arith.constant 0 : i32
    %c0_i32_0 = arith.constant 0 : i32
    return %arg0, %c0_i32 : i32, i32
  }
  func.func @transform_1(%arg0: i32) -> (i32, i32) {
    %c0_i32 = arith.constant 0 : i32
    %c0_i32_0 = arith.constant 0 : i32
    return %arg0, %c0_i32 : i32, i32
  }
}

</mosaic_0001>

<llo_original>
// kernel: view_module_forward.1
$region0: #{view_module_forward.1}
  #allocation0 [shape = 'u32[]', space=smem, size = 0x4, offset = 0x4, fixed_abs, tag = 'smem constant byte address 0x4 - core index']
  #allocation1 [shape = 'u32[144,128]{1,0:T(1,128)}', space=vmem, size = 0x12000, scoped, tag = 'internal scratch']
  %s0 = inlined_call_operand.vmem [shape: f32[2,1024], index: 0, kind: input, shape index: {}]
  %s1 = inlined_call_operand.vmem [shape: f32[2,1024], index: 1, kind: output, shape index: {}]
  %s2 = sld [smem:[#allocation0]]
  $region14: #{view_module_forward.1} parent=0
    _
  %s4 = ssub.s32 1, %s2
  %s5 = scalar_select 0, %s4, %s2
  // Predicated region
  $region2: #{view_module_forward.1} parent=0 // pred_check
    _
  $region3: #{view_module_forward.1} parent=0 // pred_check_branch
    %7 = sbr.rel (0) target = $region5
  $region4: #{view_module_forward.1} parent=0 // pred_region
    _
  $region5: #{view_module_forward.1} parent=0 // pred_fallthru
    _
  %v8 = vld [vmem:[%s0] sm:$0xff]
  %v9 = vld [vmem:[%s0 + $0x8] sm:$0xff]
  %10 = vst [vmem:[%s1] sm:$0xff] %v8
  %11 = vst [vmem:[%s1 + $0x8] sm:$0xff] %v9
  // Predicated region
  $region6: #{view_module_forward.1} parent=0 // pred_check
    _
  $region7: #{view_module_forward.1} parent=0 // pred_check_branch
    %13 = sbr.rel (0) target = $region9
  $region8: #{view_module_forward.1} parent=0 // pred_region
    _
  $region9: #{view_module_forward.1} parent=0 // pred_fallthru
    _
  // Predicated region
  $region10: #{view_module_forward.1} parent=0 // pred_check
    _
  $region11: #{view_module_forward.1} parent=0 // pred_check_branch
    %15 = sbr.rel (0) target = $region13
  $region12: #{view_module_forward.1} parent=0 // pred_region
    _
  $region13: #{view_module_forward.1} parent=0 // pred_fallthru
    _

</llo_original>
